<compile_context>
chip_gen: v5e
topology: v5e:2x2
jax: 0.10.0
libtpu: 0.0.40
codegen_flags: <defaults>
</compile_context>

<pallas_src>
import functools
import math

import jax
import jax.numpy as jnp
from jax import lax
from jax.experimental import pallas as pl
from jax.experimental.pallas import tpu as pltpu

_MIB = 1024 * 1024


def _round_up(v, m):
    return ((v + m - 1) // m) * m


def _tpu_vmem_capacity_bytes():
    try:
        return int(pltpu.get_tpu_info().vmem_capacity_bytes)
    except Exception:
        return 64 * _MIB  # conservative: v7x per-TensorCore VMEM


def _is_v5():
    try:
        return "v5" in jax.devices()[0].device_kind.lower()
    except Exception:
        return False


def _vmem_limit(footprint_bytes):
    """Scoped-VMEM limit: actual footprint + headroom, below physical capacity."""
    cap = _tpu_vmem_capacity_bytes()
    want = max(32 * _MIB, int(footprint_bytes * 1.5))
    return int(min(want, int(cap * 0.9)))


def _pick_query_tile(s_pad):
    # v5e's MXU edge is 128 -> no benefit from 256-wide query tiles, and they
    # double the (tq, S_pad) score/attn tile pressure against its tighter
    # practical VMEM budget.  v6e/v7x have a 256x256 MXU.
    if _is_v5():
        return min(128, s_pad)
    if s_pad % 256 == 0 and s_pad * 256 * 4 <= 8 * _MIB:
        return 256
    return min(128, s_pad)


# --------------------------------------------------------------------------
# Kernel 1: fused QKV projection  qkv = x @ [Wq|Wk|Wv] + [bq|bk|bv]
# --------------------------------------------------------------------------
def _qkv_proj_kernel(x_ref, wqkv_ref, bqkv_ref, qkv_ref):
    acc = jnp.dot(x_ref[...], wqkv_ref[...],
                  preferred_element_type=jnp.float32)
    acc = acc + bqkv_ref[...].astype(jnp.float32)
    # Store back in the input dtype so the attention matmuls get MXU-native
    # (e.g. bf16) operands.
    qkv_ref[...] = acc.astype(qkv_ref.dtype)


# --------------------------------------------------------------------------
# Kernel 2: scaled-dot-product attention over one query tile
# --------------------------------------------------------------------------
def _attention_kernel(q_ref, k_ref, v_ref, out_ref, attn_ref, *,
                      embdim, seq_len, s_pad):
    q = q_ref[...]                       # (tq, E_pad), input dtype
    k = k_ref[...]                       # (S_pad, E_pad), input dtype

    # Contract feature dims directly (no k.T materialization); f32 accumulate.
    scores = lax.dot_general(q, k, (((1,), (1,)), ((), ())),
                             preferred_element_type=jnp.float32)
    scores = scores * jnp.float32(1.0 / math.sqrt(embdim))  # multiply, not divide

    # Mask padded key positions (sequence padded to a lane-dense multiple of
    # 128 in the wrapper); same fill value the module uses for masking.
    if s_pad > seq_len:
        key_idx = lax.broadcasted_iota(jnp.int32, scores.shape, 1)
        scores = jnp.where(key_idx < seq_len, scores, jnp.float32(-1e9))

    # Numerically-stable softmax over keys (f32).
    m = jnp.max(scores, axis=-1, keepdims=True)
    e = jnp.exp(scores - m)
    denom = jnp.sum(e, axis=-1, keepdims=True)
    # approx=False keeps softmax rows summing to 1 within the 1e-4 tolerance.
    attn = e * pl.reciprocal(denom, approx=False)

    # TODO(synk): nn.Dropout(0.1) is identity here (eval-mode semantics).

    # Second matmul with MXU-native operand dtype, f32 accumulation.
    out = jnp.dot(attn.astype(v_ref.dtype), v_ref[...],
                  preferred_element_type=jnp.float32)

    out_ref[...] = out.astype(out_ref.dtype)
    attn_ref[...] = attn.astype(attn_ref.dtype)


# --------------------------------------------------------------------------
# Wrapper
# --------------------------------------------------------------------------
def attention_forward(x, wq, bq, wk, bk, wv, bv):
    """x: [B, S, E]; w*: [E, E] (PyTorch (out, in) layout); b*: [E].

    Returns (out [B, S, E], attn [B, S, S]) matching the PyTorch module with
    mask=None and dropout in eval mode.
    """
    B, S, E = x.shape
    dtype = x.dtype
    itemsize = jnp.dtype(dtype).itemsize

    # Pad sequence / feature dims to lane-dense multiples of 128 so every MXU
    # operand and every store is (8,128)-aligned (no masked partial stores).
    S_pad = _round_up(S, 128)
    E_pad = _round_up(E, 128)

    # Fused + padded QKV weight (E_pad, 3*E_pad) = [Wq | Wk | Wv], each segment
    # padded to E_pad columns.  Zero padding keeps padded feature columns of
    # q/k/v identically zero, so the padded contraction is exact.
    wqkv = jnp.zeros((E_pad, 3 * E_pad), dtype)
    wqkv = wqkv.at[:E, 0 * E_pad:0 * E_pad + E].set(wq.T.astype(dtype))
    wqkv = wqkv.at[:E, 1 * E_pad:1 * E_pad + E].set(wk.T.astype(dtype))
    wqkv = wqkv.at[:E, 2 * E_pad:2 * E_pad + E].set(wv.T.astype(dtype))
    bqkv = jnp.zeros((1, 3 * E_pad), dtype)
    bqkv = bqkv.at[0, 0 * E_pad:0 * E_pad + E].set(bq.astype(dtype))
    bqkv = bqkv.at[0, 1 * E_pad:1 * E_pad + E].set(bk.astype(dtype))
    bqkv = bqkv.at[0, 2 * E_pad:2 * E_pad + E].set(bv.astype(dtype))

    x_p = jnp.zeros((B, S_pad, E_pad), dtype).at[:, :S, :E].set(x)

    # ---------------- kernel 1: QKV projection ----------------
    ts = 256 if S_pad % 256 == 0 else 128
    proj_footprint = (
        2 * ts * E_pad * itemsize            # x blocks (double-buffered)
        + 1 * E_pad * 3 * E_pad * itemsize   # wqkv (single pipeline buffer)
        + 1 * 3 * E_pad * itemsize           # bqkv
        + 2 * ts * 3 * E_pad * itemsize      # qkv output blocks
        + ts * 3 * E_pad * 4                 # f32 accumulator temporary
    )

    qkv = pl.pallas_call(
        _qkv_proj_kernel,
        out_shape=jax.ShapeDtypeStruct((B, S_pad, 3 * E_pad), dtype),
        grid_spec=pltpu.PrefetchScalarGridSpec(
            num_scalar_prefetch=0,
            grid=(B, S_pad // ts),
            in_specs=[
                pl.BlockSpec((pl.Squeezed(), ts, E_pad),
                             lambda b, s: (b, s, 0)),
                # Grid-invariant weights/bias: fetched once, single buffer.
                pl.BlockSpec((E_pad, 3 * E_pad), lambda b, s: (0, 0),
                             pipeline_mode=pl.Buffered(1)),
                pl.BlockSpec((1, 3 * E_pad), lambda b, s: (0, 0),
                             pipeline_mode=pl.Buffered(1)),
            ],
            out_specs=pl.BlockSpec((pl.Squeezed(), ts, 3 * E_pad),
                                   lambda b, s: (b, s, 0)),
        ),
        compiler_params=pltpu.CompilerParams(
            dimension_semantics=("parallel", "parallel"),
            vmem_limit_bytes=_vmem_limit(proj_footprint)),
        cost_estimate=pl.CostEstimate(
            flops=int(2 * B * S_pad * E_pad * 3 * E_pad),
            transcendentals=0,
            bytes_accessed=int((B * S_pad * E_pad + E_pad * 3 * E_pad
                                + 3 * E_pad + B * S_pad * 3 * E_pad)
                               * itemsize)),
    )(x_p, wqkv, bqkv)

    # ---------------- kernel 2: attention ----------------
    tq = _pick_query_tile(S_pad)
    num_q = S_pad // tq

    attn_footprint = (
        2 * tq * E_pad * itemsize        # q blocks
        + 2 * S_pad * E_pad * itemsize   # k blocks
        + 2 * S_pad * E_pad * itemsize   # v blocks
        + 2 * tq * E_pad * itemsize      # out blocks
        + 2 * tq * S_pad * itemsize      # attn blocks
        + 4 * tq * S_pad * 4             # f32 score / softmax temporaries
    )

    kernel = functools.partial(_attention_kernel, embdim=E, seq_len=S,
                               s_pad=S_pad)

    # qkv is passed three times with different BlockSpecs: the Q tile, and the
    # full-sequence K / V slabs for the current batch (blocks of the padded
    # last dimension at block indices 0 / 1 / 2).  No scratch carry between
    # grid steps -> both grid axes are 'parallel'.
    out_p, attn_p = pl.pallas_call(
        kernel,
        out_shape=(
            jax.ShapeDtypeStruct((B, S_pad, E_pad), dtype),
            jax.ShapeDtypeStruct((B, S_pad, S_pad), dtype),
        ),
        grid_spec=pltpu.PrefetchScalarGridSpec(
            num_scalar_prefetch=0,
            grid=(B, num_q),
            in_specs=[
                pl.BlockSpec((pl.Squeezed(), tq, E_pad),
                             lambda b, q: (b, q, 0)),      # Q tile
                pl.BlockSpec((pl.Squeezed(), S_pad, E_pad),
                             lambda b, q: (b, 0, 1)),      # K (full seq)
                pl.BlockSpec((pl.Squeezed(), S_pad, E_pad),
                             lambda b, q: (b, 0, 2)),      # V (full seq)
            ],
            out_specs=[
                pl.BlockSpec((pl.Squeezed(), tq, E_pad),
                             lambda b, q: (b, q, 0)),
                pl.BlockSpec((pl.Squeezed(), tq, S_pad),
                             lambda b, q: (b, q, 0)),
            ],
        ),
        compiler_params=pltpu.CompilerParams(
            dimension_semantics=("parallel", "parallel"),
            vmem_limit_bytes=_vmem_limit(attn_footprint)),
        cost_estimate=pl.CostEstimate(
            flops=int(4 * B * S_pad * S_pad * E_pad),
            transcendentals=int(B * S_pad * S_pad),
            bytes_accessed=int((3 * B * S_pad * E_pad        # qkv read
                                + B * S_pad * E_pad          # out write
                                + B * S_pad * S_pad)         # attn write
                               * itemsize)),
    )(qkv, qkv, qkv)

    return out_p[:, :S, :E], attn_p[:, :S, :S]


def _reference(x, wq, bq, wk, bk, wv, bv):
    q = x @ wq.T + bq
    k = x @ wk.T + bk
    v = x @ wv.T + bv
    scores = jnp.einsum("bqe,bke->bqk", q, k) / jnp.sqrt(jnp.float32(x.shape[-1]))
    attn = jax.nn.softmax(scores, axis=-1)
    out = jnp.einsum("bqk,bke->bqe", attn, v)
    return out, attn


if __name__ == "__main__":
    B, S, E = 2, 8, 32  # batch, sequence, embdim

    key = jax.random.PRNGKey(0)
    kx, kq, kbq, kk, kbk, kv, kbv = jax.random.split(key, 7)

    x = jax.random.normal(kx, (B, S, E), dtype=jnp.float32)

    # Deterministic parameter init (PyTorch Linear shapes: W (E, E), b (E,))
    bound = 1.0 / math.sqrt(E)
    wq = jax.random.uniform(kq, (E, E), jnp.float32, -bound, bound)
    bq = jax.random.uniform(kbq, (E,), jnp.float32, -bound, bound)
    wk = jax.random.uniform(kk, (E, E), jnp.float32, -bound, bound)
    bk = jax.random.uniform(kbk, (E,), jnp.float32, -bound, bound)
    wv = jax.random.uniform(kv, (E, E), jnp.float32, -bound, bound)
    bv = jax.random.uniform(kbv, (E,), jnp.float32, -bound, bound)

    out, attn = attention_forward(x, wq, bq, wk, bk, wv, bv)
    out = jax.block_until_ready(out)
    attn = jax.block_until_ready(attn)

    ref_out, ref_attn = _reference(x, wq, bq, wk, bk, wv, bv)
    assert out.shape == (B, S, E) and attn.shape == (B, S, S)
    assert jnp.allclose(out, ref_out, atol=1e-4, rtol=1e-4)
    assert jnp.allclose(attn, ref_attn, atol=1e-4, rtol=1e-4)

    print("KERNEL_OK")
</pallas_src>

<mosaic_0001>
module attributes {stable_mosaic.version = 11 : i64} {
  func.func @_qkv_proj_kernel(%arg0: i32, %arg1: i32, %arg2: memref<1x128x128xf32, #tpu.memory_space<vmem>>, %arg3: memref<128x384xf32, #tpu.memory_space<vmem>>, %arg4: memref<1x384xf32, #tpu.memory_space<vmem>>, %arg5: memref<1x128x384xf32, #tpu.memory_space<vmem>>) attributes {dimension_semantics = [#tpu.dimension_semantics<parallel>, #tpu.dimension_semantics<parallel>], iteration_bounds = array<i64: 2, 1>, scalar_prefetch = 0 : i64, scratch_operands = 0 : i64, tpu.core_type = #tpu.core_type<tc>, window_params = [{transform_indices = @transform_0, window_bounds = array<i64: 1, 128, 128>}, {pipeline_mode = #tpu.pipeline_mode<synchronous>, transform_indices = @transform_1, window_bounds = array<i64: 128, 384>}, {pipeline_mode = #tpu.pipeline_mode<synchronous>, transform_indices = @transform_2, window_bounds = array<i64: 1, 384>}, {transform_indices = @transform_3, window_bounds = array<i64: 1, 128, 384>}]} {
    %c0 = arith.constant 0 : index
    %c0_0 = arith.constant 0 : index
    %c0_1 = arith.constant 0 : index
    %0 = vector.load %arg2[%c0, %c0_0, %c0_1] : memref<1x128x128xf32, #tpu.memory_space<vmem>>, vector<1x128x128xf32>
    %1 = vector.shape_cast %0 : vector<1x128x128xf32> to vector<128x128xf32>
    %c0_2 = arith.constant 0 : index
    %c0_3 = arith.constant 0 : index
    %2 = vector.load %arg3[%c0_2, %c0_3] : memref<128x384xf32, #tpu.memory_space<vmem>>, vector<128x384xf32>
    %cst = arith.constant dense<0.000000e+00> : vector<128x384xf32>
    %3 = tpu.matmul %1, %2, %cst {dimension_numbers = #tpu.dot_dimension_numbers<[1], [0], [0], [1], [0, 0, 1, 1], [], []>} : vector<128x128xf32>, vector<128x384xf32>, vector<128x384xf32> -> vector<128x384xf32>
    %c0_4 = arith.constant 0 : index
    %c0_5 = arith.constant 0 : index
    %4 = vector.load %arg4[%c0_4, %c0_5] : memref<1x384xf32, #tpu.memory_space<vmem>>, vector<1x384xf32>
    %5 = vector.broadcast %4 : vector<1x384xf32> to vector<128x384xf32>
    %6 = arith.addf %3, %5 : vector<128x384xf32>
    %c0_6 = arith.constant 0 : index
    %c0_7 = arith.constant 0 : index
    %c0_8 = arith.constant 0 : index
    %7 = vector.load %arg5[%c0_6, %c0_7, %c0_8] : memref<1x128x384xf32, #tpu.memory_space<vmem>>, vector<1x128x384xf32>
    %8 = vector.shape_cast %7 : vector<1x128x384xf32> to vector<128x384xf32>
    %9 = vector.shape_cast %6 : vector<128x384xf32> to vector<1x128x384xf32>
    tpu.vector_store %arg5[%c0_6, %c0_7, %c0_8], %9 {strides = array<i32>} : memref<1x128x384xf32, #tpu.memory_space<vmem>>, vector<1x128x384xf32>,
    return
  }
  func.func @transform_0(%arg0: i32, %arg1: i32) -> (i32, i32, i32) {
    %c0_i32 = arith.constant 0 : i32
    %c0_i32_0 = arith.constant 0 : i32
    return %arg0, %arg1, %c0_i32 : i32, i32, i32
  }
  func.func @transform_1(%arg0: i32, %arg1: i32) -> (i32, i32) {
    %c0_i32 = arith.constant 0 : i32
    %c0_i32_0 = arith.constant 0 : i32
    %c0_i32_1 = arith.constant 0 : i32
    return %c0_i32, %c0_i32_0 : i32, i32
  }
  func.func @transform_2(%arg0: i32, %arg1: i32) -> (i32, i32) {
    %c0_i32 = arith.constant 0 : i32
    %c0_i32_0 = arith.constant 0 : i32
    %c0_i32_1 = arith.constant 0 : i32
    return %c0_i32, %c0_i32_0 : i32, i32
  }
  func.func @transform_3(%arg0: i32, %arg1: i32) -> (i32, i32, i32) {
    %c0_i32 = arith.constant 0 : i32
    %c0_i32_0 = arith.constant 0 : i32
    return %arg0, %arg1, %c0_i32 : i32, i32, i32
  }
}

</mosaic_0001>

<llo_original>
// kernel: tpu_custom_call.1
$region0: #{tpu_custom_call.1}
  #allocation0 [shape = 'u32[]', space=smem, size = 0x4, offset = 0x4, fixed_abs, tag = 'smem constant byte address 0x4 - core index']
  #allocation1 [shape = 'u32[72,128]{1,0:T(1,128)}', space=vmem, size = 0x9000, scoped, tag = 'internal scratch']
  %s0 = inlined_call_operand.hbm [shape: f32[2,128,128], index: 0, kind: input, shape index: {}]
  %s1 = inlined_call_operand.hbm [shape: f32[128,384], index: 1, kind: input, shape index: {}]
  %s2 = inlined_call_operand.hbm [shape: f32[1,384], index: 2, kind: input, shape index: {}]
  %s3 = inlined_call_operand.hbm [shape: f32[2,128,384], index: 3, kind: output, shape index: {}]
  %s4 = sld [smem:[#allocation0]]
  $region57: #{tpu_custom_call.1} parent=0
    _
  %s6 = ssub.s32 1, %s4
  %s7 = scalar_select 0, %s6, %s4
  $region1: #{tpu_custom_call.1} parent=0
    #allocation2 [shape = 'u8[131072]{0}', space=vmem, size = 0x20000, scoped, tag = 'input window, operand 0']
    #allocation3 [shape = 's32[2]{0}', space=sflag, size = 0x8, scoped, tag = 'scoped memory for tpu_custom_call.1']
    #allocation4 [shape = 's32[2]{0}', space=sflag, size = 0x8, scoped, tag = 'scoped memory for tpu_custom_call.1']
    #allocation5 [shape = 'u8[196608]{0}', space=vmem, size = 0x30000, scoped, tag = 'input window, operand 1, single buffered']
    #allocation6 [shape = 's32[1]{0}', space=sflag, size = 0x4, scoped, tag = 'scoped memory for tpu_custom_call.1']
    #allocation7 [shape = 'u8[1536]{0}', space=vmem, size = 0x800, scoped, tag = 'input window, operand 2, single buffered']
    #allocation8 [shape = 'u8[393216]{0}', space=vmem, size = 0x60000, scoped, tag = 'output window, operand 0']
    %8 = vsyncpa [#allocation3], 0
    %s9 = scalar_lea.sflag [#allocation3], 1
    %10 = vsyncpa %s9, 0
    %11 = vsyncpa [#allocation6], 0
    %12 = vsyncpa [#allocation4], 0
    %s13 = scalar_lea.sflag [#allocation4], 1
    %14 = vsyncpa %s13, 0
    loop: start=0, step=1, limit=4
    $region2: #{tpu_custom_call.1} parent=1 // loop_pre_header
      _
    $region3: #{tpu_custom_call.1} parent=1 // loop_header
      %s16 = sphi 0, %s20
      %p17 = scmp.ge.s32.totalorder %s16, 4
      %s23 = sphi 0, %s35
      %s24 = sphi 0, %s31
      %s25 = sphi 0, %s23
      %s26 = sphi 0, %s24
      %s27 = sphi 0, %s25
      %s28 = sphi 0, %s26
      %s40 = sphi 0, %s42
      %s43 = sphi 0, %s40
      %s44 = sphi 0, %s43
      %s60 = sphi 0, %s44
      %s64 = sphi 0, %s64
      %s66 = sphi 0, %s64
      %s67 = sphi 0, %s66
      %s81 = sphi 0, %s67
      %s85 = sphi 0, %s85
      %s87 = sphi 0, %s85
      %s88 = sphi 0, %s87
      %s102 = sphi 0, %s88
      %s110 = sphi 0, %s112
      %s113 = sphi 0, %s110
      %s114 = sphi 0, %s113
      %s130 = sphi 0, %s114
    $region4: #{tpu_custom_call.1} parent=1 // loop_header_branch
      %19 = sbr.rel (%p17) target = $region8
    $region5: #{tpu_custom_call.1} parent=1 // loop_body
      %s21 = ssub.s32 %s16, 1
      %s22 = ssub.s32 %s16, 2
      %s29 = sadd.s32 1, %s24
      %p30 = scmp.ge.s32.totalorder %s29, 1
      %s31 = scalar_select %p30, 0, %s29
      %s32 = sadd.s32 1, %s23
      %s33 = scalar_select %p30, %s32, %s23
      %p34 = scmp.ge.s32.totalorder %s33, 2
      %s35 = scalar_select %p34, 0, %s33
      %s36 = ssub.s32 %s23, %s35
      %s37 = ssub.s32 %s24, %s31
      %s38 = sor.u32 %s36, %s37
      %p39 = scmp.eq.s32.totalorder %s38, 0
      %s41 = sadd.s32 %s40, 1
      %s42 = scalar_select %p39, %s40, %s41
      %p45 = pneg %p39
      %p46 = scmp.eq.s32.totalorder %s16, 1
      %p47 = por %p45, %p46
      %p48 = scmp.ne.s32.totalorder %s40, %s43
      %p49 = scmp.eq.s32.totalorder %s16, 0
      %p50 = por %p48, %p49
      %p51 = scmp.ne.s32.totalorder %s40, %s43
      %p52 = scmp.eq.s32.totalorder %s21, 1
      %p53 = por %p51, %p52
      %p54 = scmp.ne.s32.totalorder %s43, %s44
      %p55 = scmp.eq.s32.totalorder %s21, 0
      %p56 = por %p54, %p55
      %p57 = scmp.ne.s32.totalorder %s43, %s44
      %p58 = scmp.eq.s32.totalorder %s22, 1
      %p59 = por %p57, %p58
      %p61 = scmp.ne.s32.totalorder %s44, %s60
      %p62 = scmp.eq.s32.totalorder %s22, 0
      %p63 = por %p61, %p62
      %s65 = sadd.s32 %s64, 1
      %p68 = scmp.eq.s32.totalorder %s16, 1
      %p69 = scmp.ne.s32.totalorder %s64, %s66
      %p70 = scmp.eq.s32.totalorder %s16, 0
      %p71 = por %p69, %p70
      %p72 = scmp.ne.s32.totalorder %s64, %s66
      %p73 = scmp.eq.s32.totalorder %s21, 1
      %p74 = por %p72, %p73
      %p75 = scmp.ne.s32.totalorder %s66, %s67
      %p76 = scmp.eq.s32.totalorder %s21, 0
      %p77 = por %p75, %p76
      %p78 = scmp.ne.s32.totalorder %s66, %s67
      %p79 = scmp.eq.s32.totalorder %s22, 1
      %p80 = por %p78, %p79
      %p82 = scmp.ne.s32.totalorder %s67, %s81
      %p83 = scmp.eq.s32.totalorder %s22, 0
      %p84 = por %p82, %p83
      %s86 = sadd.s32 %s85, 1
      %p89 = scmp.eq.s32.totalorder %s16, 1
      %p90 = scmp.ne.s32.totalorder %s85, %s87
      %p91 = scmp.eq.s32.totalorder %s16, 0
      %p92 = por %p90, %p91
      %p93 = scmp.ne.s32.totalorder %s85, %s87
      %p94 = scmp.eq.s32.totalorder %s21, 1
      %p95 = por %p93, %p94
      %p96 = scmp.ne.s32.totalorder %s87, %s88
      %p97 = scmp.eq.s32.totalorder %s21, 0
      %p98 = por %p96, %p97
      %p99 = scmp.ne.s32.totalorder %s87, %s88
      %p100 = scmp.eq.s32.totalorder %s22, 1
      %p101 = por %p99, %p100
      %p103 = scmp.ne.s32.totalorder %s88, %s102
      %p104 = scmp.eq.s32.totalorder %s22, 0
      %p105 = por %p103, %p104
      %s106 = ssub.s32 %s23, %s35
      %s107 = ssub.s32 %s24, %s31
      %s108 = sor.u32 %s106, %s107
      %p109 = scmp.eq.s32.totalorder %s108, 0
      %s111 = sadd.s32 %s110, 1
      %s112 = scalar_select %p109, %s110, %s111
      %p115 = pneg %p109
      %p116 = scmp.eq.s32.totalorder %s16, 1
      %p117 = por %p115, %p116
      %p118 = scmp.ne.s32.totalorder %s110, %s113
      %p119 = scmp.eq.s32.totalorder %s16, 0
      %p120 = por %p118, %p119
      %p121 = scmp.ne.s32.totalorder %s110, %s113
      %p122 = scmp.eq.s32.totalorder %s21, 1
      %p123 = por %p121, %p122
      %p124 = scmp.ne.s32.totalorder %s113, %s114
      %p125 = scmp.eq.s32.totalorder %s21, 0
      %p126 = por %p124, %p125
      %p127 = scmp.ne.s32.totalorder %s113, %s114
      %p128 = scmp.eq.s32.totalorder %s22, 1
      %p129 = por %p127, %p128
      %p131 = scmp.ne.s32.totalorder %s114, %s130
      %p132 = scmp.eq.s32.totalorder %s22, 0
      %p133 = por %p131, %p132
      %p134 = scmp.le.s32.totalorder 1, %s16
      %p135 = scmp.lt.s32.totalorder %s16, 3
      %p136 = pnand %p134, %p135
      %p137 = pneg %p136
      // Predicated region
      $region9: #{tpu_custom_call.1} parent=5 // pred_check
        _
      $region10: #{tpu_custom_call.1} parent=5 // pred_check_branch
        %139 = sbr.rel (%p136) target = $region12
      $region11: #{tpu_custom_call.1} parent=5 // pred_region
        %s140 = ssub.s32 %s16, 1
        // Predicated region
        $region13: #{tpu_custom_call.1} parent=11 // pred_check
          %p141 = pneg %p77
        $region14: #{tpu_custom_call.1} parent=11 // pred_check_branch
          %143 = sbr.rel (%p141) target = $region16
        $region15: #{tpu_custom_call.1} parent=11 // pred_region
          %145 = vsyncadd [#allocation6], 0
          %s146 = sshll.u32 %s1, 4
          %s147 = int_to_ptr.hbm [resolvable:$true] %s146
          %s148 = sshll.u32 [#allocation5], 4
          %s149 = int_to_ptr.vmem [resolvable:$true] %s148
          %154 = dma.hbm_to_vmem [thread:$0]  %s147, 6144, %s149, [#allocation6], 384, 384, 24
        $region16: #{tpu_custom_call.1} parent=11 // pred_fallthru
          _
        // Predicated region
        $region17: #{tpu_custom_call.1} parent=11 // pred_check
          %p155 = pneg %p98
        $region18: #{tpu_custom_call.1} parent=11 // pred_check_branch
          %157 = sbr.rel (%p155) target = $region20
        $region19: #{tpu_custom_call.1} parent=11 // pred_region
          %159 = vsyncadd [#allocation6], 0
          %s161 = sshll.u32 %s2, 4
          %s162 = int_to_ptr.hbm [resolvable:$true] %s161
          %s163 = sshll.u32 [#allocation7], 4
          %s164 = int_to_ptr.vmem [resolvable:$true] %s163
          %166 = dma.hbm_to_vmem [thread:$0]  %s162, 48, %s164, [#allocation6]
        $region20: #{tpu_custom_call.1} parent=11 // pred_fallthru
          _
      $region12: #{tpu_custom_call.1} parent=5 // pred_fallthru
        _
      %p167 = scmp.lt.s32.totalorder %s16, 2
      // Predicated region
      $region21: #{tpu_custom_call.1} parent=5 // pred_check
        %p168 = pneg %p167
      $region22: #{tpu_custom_call.1} parent=5 // pred_check_branch
        %170 = sbr.rel (%p168) target = $region24
      $region23: #{tpu_custom_call.1} parent=5 // pred_region
        // Predicated region
        $region25: #{tpu_custom_call.1} parent=23 // pred_check
          %p171 = pneg %p50
        $region26: #{tpu_custom_call.1} parent=23 // pred_check_branch
          %173 = sbr.rel (%p171) target = $region28
        $region27: #{tpu_custom_call.1} parent=23 // pred_region
          %s174 = sand.u32 %s40, 1
          %s175 = scalar_lea.sflag [#allocation3], %s174
          %s176 = sand.u32 %s40, 1
          %s177 = smul.addr %s176, 128
          %s178 = scalar_lea.vmem [#allocation2], %s177
          %s179 = smul.u32 16, %s24
          %181 = vsyncadd %s175, 0
          %s182 = smul.addr %s23, 16
          %s183 = sadd.s32 %s179, %s182
          %s184 = smul.addr %s183, 8
          %s185 = scalar_lea.hbm %s0, %s184
          %s186 = sshll.u32 %s185, 4
          %s187 = int_to_ptr.hbm [resolvable:$true] %s186
          %s188 = sshll.u32 %s178, 4
          %s189 = int_to_ptr.vmem [resolvable:$true] %s188
          %194 = dma.hbm_to_vmem [thread:$0]  %s187, 2048, %s189, %s175, 128, 128, 8
        $region28: #{tpu_custom_call.1} parent=23 // pred_fallthru
          _
      $region24: #{tpu_custom_call.1} parent=5 // pred_fallthru
        _
      %p195 = scmp.le.s32.totalorder 1, %s16
      %p196 = scmp.lt.s32.totalorder %s16, 3
      %p197 = pnand %p195, %p196
      %p198 = pneg %p197
      // Predicated region
      $region29: #{tpu_custom_call.1} parent=5 // pred_check
        _
      $region30: #{tpu_custom_call.1} parent=5 // pred_check_branch
        %200 = sbr.rel (%p197) target = $region32
      $region31: #{tpu_custom_call.1} parent=5 // pred_region
        %s201 = ssub.s32 %s16, 1
        %s202 = sand.u32 %s43, 1
        %s203 = scalar_lea.sflag [#allocation3], %s202
        %s204 = sand.u32 %s43, 1
        %s205 = smul.addr %s204, 128
        %s206 = scalar_lea.vmem [#allocation2], %s205
        // Predicated region
        $region33: #{tpu_custom_call.1} parent=31 // pred_check
          %p207 = pneg %p56
        $region34: #{tpu_custom_call.1} parent=31 // pred_check_branch
          %209 = sbr.rel (%p207) target = $region36
        $region35: #{tpu_custom_call.1} parent=31 // pred_region
          %211 = dma.done %s203, 2048
        $region36: #{tpu_custom_call.1} parent=31 // pred_fallthru
          _
        // Predicated region
        $region37: #{tpu_custom_call.1} parent=31 // pred_check
          %p212 = pneg %p77
        $region38: #{tpu_custom_call.1} parent=31 // pred_check_branch
          %214 = sbr.rel (%p212) target = $region40
        $region39: #{tpu_custom_call.1} parent=31 // pred_region
          %216 = dma.done [#allocation6], 6144
        $region40: #{tpu_custom_call.1} parent=31 // pred_fallthru
          _
        // Predicated region
        $region41: #{tpu_custom_call.1} parent=31 // pred_check
          %p217 = pneg %p98
        $region42: #{tpu_custom_call.1} parent=31 // pred_check_branch
          %219 = sbr.rel (%p217) target = $region44
        $region43: #{tpu_custom_call.1} parent=31 // pred_region
          %221 = dma.done [#allocation6], 48
        $region44: #{tpu_custom_call.1} parent=31 // pred_fallthru
          _
        %s222 = sand.u32 %s43, 1
        %s223 = scalar_lea.sflag [#allocation3], %s222
        %s224 = sand.u32 %s43, 1
        %s225 = smul.addr %s224, 128
        %s226 = scalar_lea.vmem [#allocation2], %s225
        %p227 = pneg %p56
        %p228 = pneg %p53
        %p229 = pneg %p77
        %p230 = pneg %p74
        %p231 = pneg %p98
        %p232 = pneg %p95
        %p233 = pneg %p126
        %p234 = pneg %p123
        %s235 = sand.u32 %s113, 1
        %s236 = scalar_lea.sflag [#allocation4], %s235
        %s237 = sand.u32 %s113, 1
        %s238 = smul.addr %s237, 384
        %s239 = scalar_lea.vmem [#allocation8], %s238
        %s240 = smul.u32 16, %s26
        %s241 = smul.u32 16, %s26
        %v242 = vld [vmem:[%s206] sm:$0xff]
        %v243 = vld [vmem:[%s206 + $0x8] sm:$0xff]
        %v244 = vld [vmem:[%s206 + $0x10] sm:$0xff]
        %v245 = vld [vmem:[%s206 + $0x18] sm:$0xff]
        %v246 = vld [vmem:[%s206 + $0x20] sm:$0xff]
        %v247 = vld [vmem:[%s206 + $0x28] sm:$0xff]
        %v248 = vld [vmem:[%s206 + $0x30] sm:$0xff]
        %v249 = vld [vmem:[%s206 + $0x38] sm:$0xff]
        %v250 = vld [vmem:[%s206 + $0x40] sm:$0xff]
        %v251 = vld [vmem:[%s206 + $0x48] sm:$0xff]
        %v252 = vld [vmem:[%s206 + $0x50] sm:$0xff]
        %v253 = vld [vmem:[%s206 + $0x58] sm:$0xff]
        %v254 = vld [vmem:[%s206 + $0x60] sm:$0xff]
        %v255 = vld [vmem:[%s206 + $0x68] sm:$0xff]
        %v256 = vld [vmem:[%s206 + $0x70] sm:$0xff]
        %v257 = vld [vmem:[%s206 + $0x78] sm:$0xff]
        %v258 = vld [vmem:[#allocation5] sm:$0xff]
        %v259 = vld [vmem:[#allocation5 + $0x8] sm:$0xff]
        %v260 = vld [vmem:[#allocation5 + $0x10] sm:$0xff]
        %v261 = vld [vmem:[#allocation5 + $0x18] sm:$0xff]
        %v262 = vld [vmem:[#allocation5 + $0x20] sm:$0xff]
        %v263 = vld [vmem:[#allocation5 + $0x28] sm:$0xff]
        %v264 = vld [vmem:[#allocation5 + $0x30] sm:$0xff]
        %v265 = vld [vmem:[#allocation5 + $0x38] sm:$0xff]
        %v266 = vld [vmem:[#allocation5 + $0x40] sm:$0xff]
        %v267 = vld [vmem:[#allocation5 + $0x48] sm:$0xff]
        %v268 = vld [vmem:[#allocation5 + $0x50] sm:$0xff]
        %v269 = vld [vmem:[#allocation5 + $0x58] sm:$0xff]
        %v270 = vld [vmem:[#allocation5 + $0x60] sm:$0xff]
        %v271 = vld [vmem:[#allocation5 + $0x68] sm:$0xff]
        %v272 = vld [vmem:[#allocation5 + $0x70] sm:$0xff]
        %v273 = vld [vmem:[#allocation5 + $0x78] sm:$0xff]
        %v274 = vld [vmem:[#allocation5 + $0x80] sm:$0xff]
        %v275 = vld [vmem:[#allocation5 + $0x88] sm:$0xff]
        %v276 = vld [vmem:[#allocation5 + $0x90] sm:$0xff]
        %v277 = vld [vmem:[#allocation5 + $0x98] sm:$0xff]
        %v278 = vld [vmem:[#allocation5 + $0xa0] sm:$0xff]
        %v279 = vld [vmem:[#allocation5 + $0xa8] sm:$0xff]
        %v280 = vld [vmem:[#allocation5 + $0xb0] sm:$0xff]
        %v281 = vld [vmem:[#allocation5 + $0xb8] sm:$0xff]
        %v282 = vld [vmem:[#allocation5 + $0xc0] sm:$0xff]
        %v283 = vld [vmem:[#allocation5 + $0xc8] sm:$0xff]
        %v284 = vld [vmem:[#allocation5 + $0xd0] sm:$0xff]
        %v285 = vld [vmem:[#allocation5 + $0xd8] sm:$0xff]
        %v286 = vld [vmem:[#allocation5 + $0xe0] sm:$0xff]
        %v287 = vld [vmem:[#allocation5 + $0xe8] sm:$0xff]
        %v288 = vld [vmem:[#allocation5 + $0xf0] sm:$0xff]
        %v289 = vld [vmem:[#allocation5 + $0xf8] sm:$0xff]
        %v290 = vld [vmem:[#allocation5 + $0x100] sm:$0xff]
        %v291 = vld [vmem:[#allocation5 + $0x108] sm:$0xff]
        %v292 = vld [vmem:[#allocation5 + $0x110] sm:$0xff]
        %v293 = vld [vmem:[#allocation5 + $0x118] sm:$0xff]
        %v294 = vld [vmem:[#allocation5 + $0x120] sm:$0xff]
        %v295 = vld [vmem:[#allocation5 + $0x128] sm:$0xff]
        %v296 = vld [vmem:[#allocation5 + $0x130] sm:$0xff]
        %v297 = vld [vmem:[#allocation5 + $0x138] sm:$0xff]
        %v298 = vld [vmem:[#allocation5 + $0x140] sm:$0xff]
        %v299 = vld [vmem:[#allocation5 + $0x148] sm:$0xff]
        %v300 = vld [vmem:[#allocation5 + $0x150] sm:$0xff]
        %v301 = vld [vmem:[#allocation5 + $0x158] sm:$0xff]
        %v302 = vld [vmem:[#allocation5 + $0x160] sm:$0xff]
        %v303 = vld [vmem:[#allocation5 + $0x168] sm:$0xff]
        %v304 = vld [vmem:[#allocation5 + $0x170] sm:$0xff]
        %v305 = vld [vmem:[#allocation5 + $0x178] sm:$0xff]
        %v306 = vld [vmem:[#allocation7] sm:$0x7]
        %v308 = vperm.slane %v306, 0
        %v309 = vperm.slane %v306, 1
        %v310 = vperm.slane %v306, 2
        %314 = vmatpush.msra.mxu0 %v303
        %315 = vmatpush.msra.mxu0 %v300
        %316 = vmatpush.msra.mxu0 %v297
        %317 = vmatpush.msra.mxu0 %v294
        %318 = vmatpush.msra.mxu0 %v291
        %319 = vmatpush.msra.mxu0 %v288
        %320 = vmatpush.msra.mxu0 %v285
        %321 = vmatpush.msra.mxu0 %v282
        %322 = vmatpush.msra.mxu0 %v279
        %323 = vmatpush.msra.mxu0 %v276
        %324 = vmatpush.msra.mxu0 %v273
        %325 = vmatpush.msra.mxu0 %v270
        %326 = vmatpush.msra.mxu0 %v267
        %327 = vmatpush.msra.mxu0 %v264
        %328 = vmatpush.msra.mxu0 %v261
        %329 = vmatpush.msra.mxu0 %v258
        %330 = vmatmul.f32.gmra.mxu0 %v242
        %v331 = vpop.f32.mrf.mxu0
        %v332 = vadd.f32 %v308, %v331
        %333 = vmatmul.f32.gmra.mxu0 %v243
        %v334 = vpop.f32.mrf.mxu0
        %v335 = vadd.f32 %v308, %v334
        %336 = vmatmul.f32.gmra.mxu0 %v244
        %v337 = vpop.f32.mrf.mxu0
        %v338 = vadd.f32 %v308, %v337
        %339 = vmatmul.f32.gmra.mxu0 %v245
        %v340 = vpop.f32.mrf.mxu0
        %v341 = vadd.f32 %v308, %v340
        %342 = vmatmul.f32.gmra.mxu0 %v246
        %v343 = vpop.f32.mrf.mxu0
        %v344 = vadd.f32 %v308, %v343
        %345 = vmatmul.f32.gmra.mxu0 %v247
        %v346 = vpop.f32.mrf.mxu0
        %v347 = vadd.f32 %v308, %v346
        %348 = vmatmul.f32.gmra.mxu0 %v248
        %v349 = vpop.f32.mrf.mxu0
        %v350 = vadd.f32 %v308, %v349
        %351 = vmatmul.f32.gmra.mxu0 %v249
        %v352 = vpop.f32.mrf.mxu0
        %v353 = vadd.f32 %v308, %v352
        %354 = vmatmul.f32.gmra.mxu0 %v250
        %v355 = vpop.f32.mrf.mxu0
        %v356 = vadd.f32 %v308, %v355
        %357 = vmatmul.f32.gmra.mxu0 %v251
        %v358 = vpop.f32.mrf.mxu0
        %v359 = vadd.f32 %v308, %v358
        %360 = vmatmul.f32.gmra.mxu0 %v252
        %v361 = vpop.f32.mrf.mxu0
        %v362 = vadd.f32 %v308, %v361
        %363 = vmatmul.f32.gmra.mxu0 %v253
        %v364 = vpop.f32.mrf.mxu0
        %v365 = vadd.f32 %v308, %v364
        %366 = vmatmul.f32.gmra.mxu0 %v254
        %v367 = vpop.f32.mrf.mxu0
        %v368 = vadd.f32 %v308, %v367
        %369 = vmatmul.f32.gmra.mxu0 %v255
        %v370 = vpop.f32.mrf.mxu0
        %v371 = vadd.f32 %v308, %v370
        %372 = vmatmul.f32.gmra.mxu0 %v256
        %v373 = vpop.f32.mrf.mxu0
        %v374 = vadd.f32 %v308, %v373
        %375 = vmatmul.f32.gmra.mxu0 %v257
        %v376 = vpop.f32.mrf.mxu0
        %v377 = vadd.f32 %v308, %v376
        %378 = vdwg.mxu0
        %379 = vmatpush.msra.mxu0 %v304
        %380 = vmatpush.msra.mxu0 %v301
        %381 = vmatpush.msra.mxu0 %v298
        %382 = vmatpush.msra.mxu0 %v295
        %383 = vmatpush.msra.mxu0 %v292
        %384 = vmatpush.msra.mxu0 %v289
        %385 = vmatpush.msra.mxu0 %v286
        %386 = vmatpush.msra.mxu0 %v283
        %387 = vmatpush.msra.mxu0 %v280
        %388 = vmatpush.msra.mxu0 %v277
        %389 = vmatpush.msra.mxu0 %v274
        %390 = vmatpush.msra.mxu0 %v271
        %391 = vmatpush.msra.mxu0 %v268
        %392 = vmatpush.msra.mxu0 %v265
        %393 = vmatpush.msra.mxu0 %v262
        %394 = vmatpush.msra.mxu0 %v259
        %395 = vmatmul.f32.gmra.mxu0 %v242
        %v396 = vpop.f32.mrf.mxu0
        %v397 = vadd.f32 %v309, %v396
        %398 = vmatmul.f32.gmra.mxu0 %v243
        %v399 = vpop.f32.mrf.mxu0
        %v400 = vadd.f32 %v309, %v399
        %401 = vmatmul.f32.gmra.mxu0 %v244
        %v402 = vpop.f32.mrf.mxu0
        %v403 = vadd.f32 %v309, %v402
        %404 = vmatmul.f32.gmra.mxu0 %v245
        %v405 = vpop.f32.mrf.mxu0
        %v406 = vadd.f32 %v309, %v405
        %407 = vmatmul.f32.gmra.mxu0 %v246
        %v408 = vpop.f32.mrf.mxu0
        %v409 = vadd.f32 %v309, %v408
        %410 = vmatmul.f32.gmra.mxu0 %v247
        %v411 = vpop.f32.mrf.mxu0
        %v412 = vadd.f32 %v309, %v411
        %413 = vmatmul.f32.gmra.mxu0 %v248
        %v414 = vpop.f32.mrf.mxu0
        %v415 = vadd.f32 %v309, %v414
        %416 = vmatmul.f32.gmra.mxu0 %v249
        %v417 = vpop.f32.mrf.mxu0
        %v418 = vadd.f32 %v309, %v417
        %419 = vmatmul.f32.gmra.mxu0 %v250
        %v420 = vpop.f32.mrf.mxu0
        %v421 = vadd.f32 %v309, %v420
        %422 = vmatmul.f32.gmra.mxu0 %v251
        %v423 = vpop.f32.mrf.mxu0
        %v424 = vadd.f32 %v309, %v423
        %425 = vmatmul.f32.gmra.mxu0 %v252
        %v426 = vpop.f32.mrf.mxu0
        %v427 = vadd.f32 %v309, %v426
        %428 = vmatmul.f32.gmra.mxu0 %v253
        %v429 = vpop.f32.mrf.mxu0
        %v430 = vadd.f32 %v309, %v429
        %431 = vmatmul.f32.gmra.mxu0 %v254
        %v432 = vpop.f32.mrf.mxu0
        %v433 = vadd.f32 %v309, %v432
        %434 = vmatmul.f32.gmra.mxu0 %v255
        %v435 = vpop.f32.mrf.mxu0
        %v436 = vadd.f32 %v309, %v435
        %437 = vmatmul.f32.gmra.mxu0 %v256
        %v438 = vpop.f32.mrf.mxu0
        %v439 = vadd.f32 %v309, %v438
        %440 = vmatmul.f32.gmra.mxu0 %v257
        %v441 = vpop.f32.mrf.mxu0
        %v442 = vadd.f32 %v309, %v441
        %443 = vdwg.mxu0
        %444 = vmatpush.msra.mxu0 %v305
        %445 = vmatpush.msra.mxu0 %v302
        %446 = vmatpush.msra.mxu0 %v299
        %447 = vmatpush.msra.mxu0 %v296
        %448 = vmatpush.msra.mxu0 %v293
        %449 = vmatpush.msra.mxu0 %v290
        %450 = vmatpush.msra.mxu0 %v287
        %451 = vmatpush.msra.mxu0 %v284
        %452 = vmatpush.msra.mxu0 %v281
        %453 = vmatpush.msra.mxu0 %v278
        %454 = vmatpush.msra.mxu0 %v275
        %455 = vmatpush.msra.mxu0 %v272
        %456 = vmatpush.msra.mxu0 %v269
        %457 = vmatpush.msra.mxu0 %v266
        %458 = vmatpush.msra.mxu0 %v263
        %459 = vmatpush.msra.mxu0 %v260
        %460 = vmatmul.f32.gmra.mxu0 %v242
        %v461 = vpop.f32.mrf.mxu0
        %v462 = vadd.f32 %v310, %v461
        %463 = vmatmul.f32.gmra.mxu0 %v243
        %v464 = vpop.f32.mrf.mxu0
        %v465 = vadd.f32 %v310, %v464
        %466 = vmatmul.f32.gmra.mxu0 %v244
        %v467 = vpop.f32.mrf.mxu0
        %v468 = vadd.f32 %v310, %v467
        %469 = vmatmul.f32.gmra.mxu0 %v245
        %v470 = vpop.f32.mrf.mxu0
        %v471 = vadd.f32 %v310, %v470
        %472 = vmatmul.f32.gmra.mxu0 %v246
        %v473 = vpop.f32.mrf.mxu0
        %v474 = vadd.f32 %v310, %v473
        %475 = vmatmul.f32.gmra.mxu0 %v247
        %v476 = vpop.f32.mrf.mxu0
        %v477 = vadd.f32 %v310, %v476
        %478 = vmatmul.f32.gmra.mxu0 %v248
        %v479 = vpop.f32.mrf.mxu0
        %v480 = vadd.f32 %v310, %v479
        %481 = vmatmul.f32.gmra.mxu0 %v249
        %v482 = vpop.f32.mrf.mxu0
        %v483 = vadd.f32 %v310, %v482
        %484 = vmatmul.f32.gmra.mxu0 %v250
        %v485 = vpop.f32.mrf.mxu0
        %v486 = vadd.f32 %v310, %v485
        %487 = vmatmul.f32.gmra.mxu0 %v251
        %v488 = vpop.f32.mrf.mxu0
        %v489 = vadd.f32 %v310, %v488
        %490 = vmatmul.f32.gmra.mxu0 %v252
        %v491 = vpop.f32.mrf.mxu0
        %v492 = vadd.f32 %v310, %v491
        %493 = vmatmul.f32.gmra.mxu0 %v253
        %v494 = vpop.f32.mrf.mxu0
        %v495 = vadd.f32 %v310, %v494
        %496 = vmatmul.f32.gmra.mxu0 %v254
        %v497 = vpop.f32.mrf.mxu0
        %v498 = vadd.f32 %v310, %v497
        %499 = vmatmul.f32.gmra.mxu0 %v255
        %v500 = vpop.f32.mrf.mxu0
        %v501 = vadd.f32 %v310, %v500
        %502 = vmatmul.f32.gmra.mxu0 %v256
        %v503 = vpop.f32.mrf.mxu0
        %v504 = vadd.f32 %v310, %v503
        %505 = vmatmul.f32.gmra.mxu0 %v257
        %v506 = vpop.f32.mrf.mxu0
        %v507 = vadd.f32 %v310, %v506
        %508 = vdwg.mxu0
        %509 = vst [vmem:[%s239] sm:$0xff] %v332
        %510 = vst [vmem:[%s239 + $0x8] sm:$0xff] %v397
        %511 = vst [vmem:[%s239 + $0x10] sm:$0xff] %v462
        %512 = vst [vmem:[%s239 + $0x18] sm:$0xff] %v335
        %513 = vst [vmem:[%s239 + $0x20] sm:$0xff] %v400
        %514 = vst [vmem:[%s239 + $0x28] sm:$0xff] %v465
        %515 = vst [vmem:[%s239 + $0x30] sm:$0xff] %v338
        %516 = vst [vmem:[%s239 + $0x38] sm:$0xff] %v403
        %517 = vst [vmem:[%s239 + $0x40] sm:$0xff] %v468
        %518 = vst [vmem:[%s239 + $0x48] sm:$0xff] %v341
        %519 = vst [vmem:[%s239 + $0x50] sm:$0xff] %v406
        %520 = vst [vmem:[%s239 + $0x58] sm:$0xff] %v471
        %521 = vst [vmem:[%s239 + $0x60] sm:$0xff] %v344
        %522 = vst [vmem:[%s239 + $0x68] sm:$0xff] %v409
        %523 = vst [vmem:[%s239 + $0x70] sm:$0xff] %v474
        %524 = vst [vmem:[%s239 + $0x78] sm:$0xff] %v347
        %525 = vst [vmem:[%s239 + $0x80] sm:$0xff] %v412
        %526 = vst [vmem:[%s239 + $0x88] sm:$0xff] %v477
        %527 = vst [vmem:[%s239 + $0x90] sm:$0xff] %v350
        %528 = vst [vmem:[%s239 + $0x98] sm:$0xff] %v415
        %529 = vst [vmem:[%s239 + $0xa0] sm:$0xff] %v480
        %530 = vst [vmem:[%s239 + $0xa8] sm:$0xff] %v353
        %531 = vst [vmem:[%s239 + $0xb0] sm:$0xff] %v418
        %532 = vst [vmem:[%s239 + $0xb8] sm:$0xff] %v483
        %533 = vst [vmem:[%s239 + $0xc0] sm:$0xff] %v356
        %534 = vst [vmem:[%s239 + $0xc8] sm:$0xff] %v421
        %535 = vst [vmem:[%s239 + $0xd0] sm:$0xff] %v486
        %536 = vst [vmem:[%s239 + $0xd8] sm:$0xff] %v359
        %537 = vst [vmem:[%s239 + $0xe0] sm:$0xff] %v424
        %538 = vst [vmem:[%s239 + $0xe8] sm:$0xff] %v489
        %539 = vst [vmem:[%s239 + $0xf0] sm:$0xff] %v362
        %540 = vst [vmem:[%s239 + $0xf8] sm:$0xff] %v427
        %541 = vst [vmem:[%s239 + $0x100] sm:$0xff] %v492
        %542 = vst [vmem:[%s239 + $0x108] sm:$0xff] %v365
        %543 = vst [vmem:[%s239 + $0x110] sm:$0xff] %v430
        %544 = vst [vmem:[%s239 + $0x118] sm:$0xff] %v495
        %545 = vst [vmem:[%s239 + $0x120] sm:$0xff] %v368
        %546 = vst [vmem:[%s239 + $0x128] sm:$0xff] %v433
        %547 = vst [vmem:[%s239 + $0x130] sm:$0xff] %v498
        %548 = vst [vmem:[%s239 + $0x138] sm:$0xff] %v371
        %549 = vst [vmem:[%s239 + $0x140] sm:$0xff] %v436
        %550 = vst [vmem:[%s239 + $0x148] sm:$0xff] %v501
        %551 = vst [vmem:[%s239 + $0x150] sm:$0xff] %v374
        %552 = vst [vmem:[%s239 + $0x158] sm:$0xff] %v439
        %553 = vst [vmem:[%s239 + $0x160] sm:$0xff] %v504
        %554 = vst [vmem:[%s239 + $0x168] sm:$0xff] %v377
        %555 = vst [vmem:[%s239 + $0x170] sm:$0xff] %v442
        %556 = vst [vmem:[%s239 + $0x178] sm:$0xff] %v507
        %s557 = sand.u32 %s113, 1
        %s558 = scalar_lea.sflag [#allocation4], %s557
        %s559 = sand.u32 %s113, 1
        %s560 = smul.addr %s559, 384
        %s561 = scalar_lea.vmem [#allocation8], %s560
        // Predicated region
        $region45: #{tpu_custom_call.1} parent=31 // pred_check
          %p562 = pneg %p123
        $region46: #{tpu_custom_call.1} parent=31 // pred_check_branch
          %564 = sbr.rel (%p562) target = $region48
        $region47: #{tpu_custom_call.1} parent=31 // pred_region
          %s565 = smul.u32 16, %s26
          %567 = vsyncadd %s558, 0
          %s568 = smul.addr %s565, 3
          %s569 = smul.addr %s25, 48
          %s570 = sadd.s32 %s568, %s569
          %s571 = smul.addr %s570, 8
          %s572 = scalar_lea.hbm %s3, %s571
          %s573 = sshll.u32 %s561, 4
          %s574 = int_to_ptr.vmem [resolvable:$true] %s573
          %s575 = sshll.u32 %s572, 4
          %s576 = int_to_ptr.hbm [resolvable:$true] %s575
          %581 = dma.vmem_to_hbm [thread:$0]  %s574, 6144, %s576, %s558, 384, 384, 24
        $region48: #{tpu_custom_call.1} parent=31 // pred_fallthru
          _
      $region32: #{tpu_custom_call.1} parent=5 // pred_fallthru
        _
      %p582 = scmp.le.s32.totalorder 2, %s16
      // Predicated region
      $region49: #{tpu_custom_call.1} parent=5 // pred_check
        %p583 = pneg %p582
      $region50: #{tpu_custom_call.1} parent=5 // pred_check_branch
        %585 = sbr.rel (%p583) target = $region52
      $region51: #{tpu_custom_call.1} parent=5 // pred_region
        %s586 = ssub.s32 %s16, 2
        // Predicated region
        $region53: #{tpu_custom_call.1} parent=51 // pred_check
          %p587 = pneg %p129
        $region54: #{tpu_custom_call.1} parent=51 // pred_check_branch
          %589 = sbr.rel (%p587) target = $region56
        $region55: #{tpu_custom_call.1} parent=51 // pred_region
          %s590 = sand.u32 %s114, 1
          %s591 = scalar_lea.sflag [#allocation4], %s590
          %s592 = sand.u32 %s114, 1
          %s593 = smul.addr %s592, 384
          %s594 = scalar_lea.vmem [#allocation8], %s593
          %596 = dma.done %s591, 6144
        $region56: #{tpu_custom_call.1} parent=51 // pred_fallthru
          _
      $region52: #{tpu_custom_call.1} parent=5 // pred_fallthru
        _
    $region6: #{tpu_custom_call.1} parent=1 // loop_footer
      %s20 = sadd.s32 1, %s16
    $region7: #{tpu_custom_call.1} parent=1 // loop_footer_branch
      %15 = sbr.rel target = $region3
    $region8: #{tpu_custom_call.1} parent=1 // loop_exit
      _
    %597 = vsyncpa [#allocation3], 1
    %s598 = scalar_lea.sflag [#allocation3], 1
    %599 = vsyncpa %s598, 1
    %600 = vsyncpa [#allocation6], 1
    %601 = vsyncpa [#allocation4], 1
    %s602 = scalar_lea.sflag [#allocation4], 1
    %603 = vsyncpa %s602, 1

</llo_original>
